<compile_context>
chip_gen: v5e
topology: v5e:2x2
jax: 0.10.0
libtpu: 0.0.40
codegen_flags: <defaults>
</compile_context>

<pallas_src>
import functools

import jax
import jax.numpy as jnp
import numpy as np
from jax.experimental import pallas as pl
from jax.experimental.pallas import tpu as pltpu

# ----- hyperparameters from the PyTorch module -------------------------------
X0, X1 = -1.0, 1.0
L_DOMAIN = X1 - X0
HIDDEN = 50
LAYERS = 5
M = 5
OUT_DIM = 1
IN_DIM = 2 * M + 2       # = 12  (feature order: [t, 1, cos(1..M), sin(1..M)])

HP = 56                  # hidden padded to a sublane-aligned multiple of 8
UVH = 3 * HP             # fused U|V|input pre-activation rows (168)
TRIG = 2 * M + 1         # [1, cos(1..M), sin(1..M)] rows produced by one EUP pass


# ----- Pallas kernel (transposed layout: (features, batch_tile)) --------------
def modified_mlp_kernel(xt_ref, om_ref, ph_ref,
                        w1_ref,
                        wz_ref, bz_ref,
                        wf_ref, bf_ref,
                        o_ref):
    t_row = xt_ref[0:1, :]                     # (1, tb)
    x_row = xt_ref[1:2, :]                     # (1, tb)

    # single EUP pass: row0 = cos(0)=1 (ones row), rows 1..M = cos(w x),
    # rows M+1..2M = cos(w x - pi/2) = sin(w x).
    trig = jnp.cos(om_ref[...] * x_row + ph_ref[...])     # (2M+1, tb)

    # feature block [t ; 1 ; cos ; sin]  ->  (IN_DIM, tb)
    feat = jnp.concatenate([t_row, trig], axis=0)

    # fused U|V|input projection in ONE matmul; bias is folded into the
    # ones column of w1, so there is no separate broadcast add.
    pre = jnp.dot(w1_ref[...], feat,
                  preferred_element_type=jnp.float32)     # (3*HP, tb)
    uvh = jnp.tanh(pre)

    u = uvh[0:HP, :]                           # (HP, tb)
    v = uvh[HP:2 * HP, :]
    h = uvh[2 * HP:3 * HP, :]
    d = v - u                                  # hoisted; loop uses u + z*d

    # gated residual updates (static trip count -> unrolled)
    for i in range(LAYERS - 1):
        z = jnp.tanh(jnp.dot(wz_ref[i], h,
                             preferred_element_type=jnp.float32) + bz_ref[i])
        h = u + z * d

    o_ref[...] = (jnp.dot(wf_ref[...], h,
                          preferred_element_type=jnp.float32)
                  + bf_ref[...]).astype(o_ref.dtype)      # (1, tb)


# ----- parameter packing (transpose / fuse / zero-pad, done once per call) ----
def _pack_params(params):
    pad_h = HP - HIDDEN

    def pad_out(w, b):                         # (IN, H)->(IN, HP), (1, H)->(1, HP)
        return (jnp.pad(w, ((0, 0), (0, pad_h))),
                jnp.pad(b, ((0, 0), (0, pad_h))))

    wu, bu = pad_out(params["wu"], params["bu"])
    wv, bv = pad_out(params["wv"], params["bv"])
    wi, bi = pad_out(params["wi"], params["bi"])

    # fused first-stage weight (3*HP, IN_DIM), feature-column order
    # [t, 1, cos(1..M), sin(1..M)]; bias folded into the "1" column.
    w1 = jnp.concatenate([wu, wv, wi], axis=1).T           # (3*HP, IN_DIM)
    b1 = jnp.concatenate([bu, bv, bi], axis=1).T           # (3*HP, 1)
    w1 = w1.at[:, 1:2].add(b1)

    wz_t = jnp.pad(jnp.transpose(params["wz"], (0, 2, 1)),
                   ((0, 0), (0, pad_h), (0, pad_h)))        # (L-1, HP, HP)
    bz_t = jnp.pad(jnp.transpose(params["bz"], (0, 2, 1)),
                   ((0, 0), (0, pad_h), (0, 0)))            # (L-1, HP, 1)
    wf_t = jnp.pad(params["wf"].T, ((0, 0), (0, pad_h)))    # (1, HP)
    bf = params["bf"]                                       # (1, 1)

    # phase-trick trig constants: cos(om11 * x + ph11) -> [1, cos, sin] rows.
    omegas = params["omegas"][0]                            # (M,)
    om11 = jnp.concatenate(
        [jnp.zeros((1,), jnp.float32), omegas, omegas])[:, None]       # (2M+1, 1)
    ph11 = jnp.concatenate(
        [jnp.zeros((M + 1,), jnp.float32),
         jnp.full((M,), -0.5 * np.pi, jnp.float32)])[:, None]          # (2M+1, 1)

    return om11, ph11, w1, wz_t, bz_t, wf_t, bf


# ----- wrapper ----------------------------------------------------------------
def modified_mlp_pallas(x, params, *, tb=None):
    n = x.shape[0]
    assert n % 128 == 0, "batch must be a multiple of 128 (lane width); pad it"
    if tb is None:
        # large tile to amortize ~0.35us/step grid overhead; must divide n.
        tb = min(4096, n)
        while n % tb != 0:
            tb -= 128
    assert tb % 128 == 0, "batch tile must be a multiple of 128 (lane width)"
    assert n % tb == 0, "batch must be a multiple of the batch tile (pad it)"

    om11, ph11, w1, wz_t, bz_t, wf_t, bf = _pack_params(params)
    xt = x.T                                                    # (2, n)

    def full_spec(shape):
        nd = len(shape)
        return pl.BlockSpec(shape, lambda i, _nd=nd: (0,) * _nd)

    in_specs = [
        pl.BlockSpec((2, tb), lambda i: (0, i)),               # x^T tile
        full_spec((TRIG, 1)),                                  # omegas [0,w,w]
        full_spec((TRIG, 1)),                                  # phases [0,0,-pi/2]
        full_spec((UVH, IN_DIM)),                              # fused U|V|input weight
        full_spec((LAYERS - 1, HP, HP)),                       # Z weights (transposed)
        full_spec((LAYERS - 1, HP, 1)),                        # Z biases
        full_spec((1, HP)),                                    # final weights
        full_spec((1, 1)),                                     # final bias
    ]

    weight_bytes = 4 * int(om11.size + ph11.size + w1.size + wz_t.size
                           + bz_t.size + wf_t.size + bf.size)
    cost = pl.CostEstimate(flops=37_000 * n,
                           transcendentals=460 * n,
                           bytes_accessed=12 * n + weight_bytes)

    out = pl.pallas_call(
        modified_mlp_kernel,
        out_shape=jax.ShapeDtypeStruct((1, n), jnp.float32),   # lane-dense output
        grid_spec=pltpu.PrefetchScalarGridSpec(
            num_scalar_prefetch=0,
            grid=(n // tb,),
            in_specs=in_specs,
            out_specs=pl.BlockSpec((1, tb), lambda i: (0, i)),
        ),
        compiler_params=pltpu.CompilerParams(
            dimension_semantics=("parallel",),
            vmem_limit_bytes=48 << 20),
        cost_estimate=cost,
    )(xt, om11, ph11, w1, wz_t, bz_t, wf_t, bf)

    return out.T                                               # (n, 1)


# ----- pure-JAX reference (mirrors the PyTorch forward exactly) ---------------
def modified_mlp_ref(x, params):
    t, xs = x[:, 0:1], x[:, 1:2]
    xw = xs * params["omegas"]                                 # (N,1)@(1,M) outer product
    emb = jnp.concatenate([jnp.ones_like(xs), jnp.cos(xw), jnp.sin(xw)], axis=1)
    feat = jnp.concatenate([t, emb], axis=1)
    u = jnp.tanh(feat @ params["wu"] + params["bu"])
    v = jnp.tanh(feat @ params["wv"] + params["bv"])
    h = jnp.tanh(feat @ params["wi"] + params["bi"])
    for i in range(LAYERS - 1):
        z = jnp.tanh(h @ params["wz"][i] + params["bz"][i])
        h = (1.0 - z) * u + z * v
    return h @ params["wf"] + params["bf"]


# ----- deterministic parameter init (Linear-style uniform +-1/sqrt(fan_in)) ---
def init_params(key):
    def lin(k, fan_in, fan_out):
        kw, kb = jax.random.split(k)
        bound = 1.0 / np.sqrt(fan_in)
        w = jax.random.uniform(kw, (fan_in, fan_out), jnp.float32, -bound, bound)
        b = jax.random.uniform(kb, (1, fan_out), jnp.float32, -bound, bound)
        return w, b

    keys = jax.random.split(key, 5 + (LAYERS - 1))
    wu, bu = lin(keys[0], IN_DIM, HIDDEN)
    wv, bv = lin(keys[1], IN_DIM, HIDDEN)
    wi, bi = lin(keys[2], IN_DIM, HIDDEN)
    wf, bf = lin(keys[3], HIDDEN, OUT_DIM)
    wz_list, bz_list = [], []
    for i in range(LAYERS - 1):
        w, b = lin(keys[4 + i], HIDDEN, HIDDEN)
        wz_list.append(w)
        bz_list.append(b)
    omegas = (jnp.arange(1, M + 1, dtype=jnp.float32)[None, :]
              * 2.0 * np.pi / L_DOMAIN)                        # (1, M)
    return {
        "omegas": omegas,
        "wu": wu, "bu": bu,
        "wv": wv, "bv": bv,
        "wi": wi, "bi": bi,
        "wz": jnp.stack(wz_list, axis=0),                      # (LAYERS-1, H, H)
        "bz": jnp.stack(bz_list, axis=0),                      # (LAYERS-1, 1, H)
        "wf": wf, "bf": bf,
    }


if __name__ == "__main__":
    key = jax.random.PRNGKey(0)
    kx, kp = jax.random.split(key)

    N = 256   # small test batch; tb=128 gives a 2-step grid (exercises tiling)
    x = jax.random.uniform(kx, (N, 2), jnp.float32, minval=X0, maxval=X1)
    params = init_params(kp)

    run = jax.jit(functools.partial(modified_mlp_pallas, tb=128))
    out = jax.block_until_ready(run(x, params))

    ref = modified_mlp_ref(x, params)
    np.testing.assert_allclose(np.asarray(out), np.asarray(ref),
                               rtol=1e-5, atol=2e-5)
    print("KERNEL_OK")
</pallas_src>

<mosaic_0001>
module attributes {stable_mosaic.version = 11 : i64} {
  func.func @modified_mlp_kernel(%arg0: i32, %arg1: memref<2x128xf32, #tpu.memory_space<vmem>>, %arg2: memref<11x1xf32, #tpu.memory_space<vmem>>, %arg3: memref<11x1xf32, #tpu.memory_space<vmem>>, %arg4: memref<168x12xf32, #tpu.memory_space<vmem>>, %arg5: memref<4x56x56xf32, #tpu.memory_space<vmem>>, %arg6: memref<4x56x1xf32, #tpu.memory_space<vmem>>, %arg7: memref<1x56xf32, #tpu.memory_space<vmem>>, %arg8: memref<1x1xf32, #tpu.memory_space<vmem>>, %arg9: memref<1x128xf32, #tpu.memory_space<vmem>>) attributes {dimension_semantics = [#tpu.dimension_semantics<parallel>], iteration_bounds = array<i64: 2>, scalar_prefetch = 0 : i64, scratch_operands = 0 : i64, tpu.core_type = #tpu.core_type<tc>, window_params = [{transform_indices = @transform_0, window_bounds = array<i64: 2, 128>}, {pipeline_mode = #tpu.pipeline_mode<synchronous>, transform_indices = @transform_1, window_bounds = array<i64: 11, 1>}, {pipeline_mode = #tpu.pipeline_mode<synchronous>, transform_indices = @transform_2, window_bounds = array<i64: 11, 1>}, {pipeline_mode = #tpu.pipeline_mode<synchronous>, transform_indices = @transform_3, window_bounds = array<i64: 168, 12>}, {pipeline_mode = #tpu.pipeline_mode<synchronous>, transform_indices = @transform_4, window_bounds = array<i64: 4, 56, 56>}, {pipeline_mode = #tpu.pipeline_mode<synchronous>, transform_indices = @transform_5, window_bounds = array<i64: 4, 56, 1>}, {pipeline_mode = #tpu.pipeline_mode<synchronous>, transform_indices = @transform_6, window_bounds = array<i64: 1, 56>}, {pipeline_mode = #tpu.pipeline_mode<synchronous>, transform_indices = @transform_7, window_bounds = array<i64: 1, 1>}, {transform_indices = @transform_8, window_bounds = array<i64: 1, 128>}]} {
    %c0 = arith.constant 0 : index
    %c0_0 = arith.constant 0 : index
    %0 = vector.load %arg1[%c0, %c0_0] : memref<2x128xf32, #tpu.memory_space<vmem>>, vector<1x128xf32>
    %c1 = arith.constant 1 : index
    %c0_1 = arith.constant 0 : index
    %1 = vector.load %arg1[%c1, %c0_1] : memref<2x128xf32, #tpu.memory_space<vmem>>, vector<1x128xf32>
    %c0_2 = arith.constant 0 : index
    %c0_3 = arith.constant 0 : index
    %2 = vector.load %arg2[%c0_2, %c0_3] : memref<11x1xf32, #tpu.memory_space<vmem>>, vector<11x1xf32>
    %3 = vector.broadcast %2 : vector<11x1xf32> to vector<11x128xf32>
    %4 = vector.broadcast %1 : vector<1x128xf32> to vector<11x128xf32>
    %5 = arith.mulf %3, %4 : vector<11x128xf32>
    %c0_4 = arith.constant 0 : index
    %c0_5 = arith.constant 0 : index
    %6 = vector.load %arg3[%c0_4, %c0_5] : memref<11x1xf32, #tpu.memory_space<vmem>>, vector<11x1xf32>
    %7 = vector.broadcast %6 : vector<11x1xf32> to vector<11x128xf32>
    %8 = arith.addf %5, %7 : vector<11x128xf32>
    %9 = math.cos %8 : vector<11x128xf32>
    %10 = tpu.concatenate %0, %9 in 0 : vector<1x128xf32>, vector<11x128xf32> -> vector<12x128xf32>
    %c0_6 = arith.constant 0 : index
    %c0_7 = arith.constant 0 : index
    %11 = vector.load %arg4[%c0_6, %c0_7] : memref<168x12xf32, #tpu.memory_space<vmem>>, vector<168x12xf32>
    %cst = arith.constant dense<0.000000e+00> : vector<168x128xf32>
    %12 = tpu.matmul %11, %10, %cst {dimension_numbers = #tpu.dot_dimension_numbers<[1], [0], [0], [1], [0, 0, 1, 1], [], []>} : vector<168x12xf32>, vector<12x128xf32>, vector<168x128xf32> -> vector<168x128xf32>
    %13 = math.tanh %12 : vector<168x128xf32>
    %14 = vector.extract_strided_slice %13 {offsets = [0, 0], sizes = [56, 128], strides = [1, 1]} : vector<168x128xf32> to vector<56x128xf32>
    %15 = vector.extract_strided_slice %13 {offsets = [56, 0], sizes = [56, 128], strides = [1, 1]} : vector<168x128xf32> to vector<56x128xf32>
    %16 = vector.extract_strided_slice %13 {offsets = [112, 0], sizes = [56, 128], strides = [1, 1]} : vector<168x128xf32> to vector<56x128xf32>
    %17 = arith.subf %15, %14 : vector<56x128xf32>
    %c0_8 = arith.constant 0 : index
    %c0_9 = arith.constant 0 : index
    %c0_10 = arith.constant 0 : index
    %18 = vector.load %arg5[%c0_8, %c0_9, %c0_10] : memref<4x56x56xf32, #tpu.memory_space<vmem>>, vector<1x56x56xf32>
    %19 = vector.shape_cast %18 : vector<1x56x56xf32> to vector<56x56xf32>
    %cst_11 = arith.constant dense<0.000000e+00> : vector<56x128xf32>
    %20 = tpu.matmul %19, %16, %cst_11 {dimension_numbers = #tpu.dot_dimension_numbers<[1], [0], [0], [1], [0, 0, 1, 1], [], []>} : vector<56x56xf32>, vector<56x128xf32>, vector<56x128xf32> -> vector<56x128xf32>
    %c0_12 = arith.constant 0 : index
    %c0_13 = arith.constant 0 : index
    %c0_14 = arith.constant 0 : index
    %21 = vector.load %arg6[%c0_12, %c0_13, %c0_14] : memref<4x56x1xf32, #tpu.memory_space<vmem>>, vector<1x56x1xf32>
    %22 = vector.shape_cast %21 : vector<1x56x1xf32> to vector<56x1xf32>
    %23 = vector.broadcast %22 : vector<56x1xf32> to vector<56x128xf32>
    %24 = arith.addf %20, %23 : vector<56x128xf32>
    %25 = math.tanh %24 : vector<56x128xf32>
    %26 = arith.mulf %25, %17 : vector<56x128xf32>
    %27 = arith.addf %14, %26 : vector<56x128xf32>
    %c1_15 = arith.constant 1 : index
    %c0_16 = arith.constant 0 : index
    %c0_17 = arith.constant 0 : index
    %28 = vector.load %arg5[%c1_15, %c0_16, %c0_17] : memref<4x56x56xf32, #tpu.memory_space<vmem>>, vector<1x56x56xf32>
    %29 = vector.shape_cast %28 : vector<1x56x56xf32> to vector<56x56xf32>
    %cst_18 = arith.constant dense<0.000000e+00> : vector<56x128xf32>
    %30 = tpu.matmul %29, %27, %cst_18 {dimension_numbers = #tpu.dot_dimension_numbers<[1], [0], [0], [1], [0, 0, 1, 1], [], []>} : vector<56x56xf32>, vector<56x128xf32>, vector<56x128xf32> -> vector<56x128xf32>
    %c1_19 = arith.constant 1 : index
    %c0_20 = arith.constant 0 : index
    %c0_21 = arith.constant 0 : index
    %31 = vector.load %arg6[%c1_19, %c0_20, %c0_21] : memref<4x56x1xf32, #tpu.memory_space<vmem>>, vector<1x56x1xf32>
    %32 = vector.shape_cast %31 : vector<1x56x1xf32> to vector<56x1xf32>
    %33 = vector.broadcast %32 : vector<56x1xf32> to vector<56x128xf32>
    %34 = arith.addf %30, %33 : vector<56x128xf32>
    %35 = math.tanh %34 : vector<56x128xf32>
    %36 = arith.mulf %35, %17 : vector<56x128xf32>
    %37 = arith.addf %14, %36 : vector<56x128xf32>
    %c2 = arith.constant 2 : index
    %c0_22 = arith.constant 0 : index
    %c0_23 = arith.constant 0 : index
    %38 = vector.load %arg5[%c2, %c0_22, %c0_23] : memref<4x56x56xf32, #tpu.memory_space<vmem>>, vector<1x56x56xf32>
    %39 = vector.shape_cast %38 : vector<1x56x56xf32> to vector<56x56xf32>
    %cst_24 = arith.constant dense<0.000000e+00> : vector<56x128xf32>
    %40 = tpu.matmul %39, %37, %cst_24 {dimension_numbers = #tpu.dot_dimension_numbers<[1], [0], [0], [1], [0, 0, 1, 1], [], []>} : vector<56x56xf32>, vector<56x128xf32>, vector<56x128xf32> -> vector<56x128xf32>
    %c2_25 = arith.constant 2 : index
    %c0_26 = arith.constant 0 : index
    %c0_27 = arith.constant 0 : index
    %41 = vector.load %arg6[%c2_25, %c0_26, %c0_27] : memref<4x56x1xf32, #tpu.memory_space<vmem>>, vector<1x56x1xf32>
    %42 = vector.shape_cast %41 : vector<1x56x1xf32> to vector<56x1xf32>
    %43 = vector.broadcast %42 : vector<56x1xf32> to vector<56x128xf32>
    %44 = arith.addf %40, %43 : vector<56x128xf32>
    %45 = math.tanh %44 : vector<56x128xf32>
    %46 = arith.mulf %45, %17 : vector<56x128xf32>
    %47 = arith.addf %14, %46 : vector<56x128xf32>
    %c3 = arith.constant 3 : index
    %c0_28 = arith.constant 0 : index
    %c0_29 = arith.constant 0 : index
    %48 = vector.load %arg5[%c3, %c0_28, %c0_29] : memref<4x56x56xf32, #tpu.memory_space<vmem>>, vector<1x56x56xf32>
    %49 = vector.shape_cast %48 : vector<1x56x56xf32> to vector<56x56xf32>
    %cst_30 = arith.constant dense<0.000000e+00> : vector<56x128xf32>
    %50 = tpu.matmul %49, %47, %cst_30 {dimension_numbers = #tpu.dot_dimension_numbers<[1], [0], [0], [1], [0, 0, 1, 1], [], []>} : vector<56x56xf32>, vector<56x128xf32>, vector<56x128xf32> -> vector<56x128xf32>
    %c3_31 = arith.constant 3 : index
    %c0_32 = arith.constant 0 : index
    %c0_33 = arith.constant 0 : index
    %51 = vector.load %arg6[%c3_31, %c0_32, %c0_33] : memref<4x56x1xf32, #tpu.memory_space<vmem>>, vector<1x56x1xf32>
    %52 = vector.shape_cast %51 : vector<1x56x1xf32> to vector<56x1xf32>
    %53 = vector.broadcast %52 : vector<56x1xf32> to vector<56x128xf32>
    %54 = arith.addf %50, %53 : vector<56x128xf32>
    %55 = math.tanh %54 : vector<56x128xf32>
    %56 = arith.mulf %55, %17 : vector<56x128xf32>
    %57 = arith.addf %14, %56 : vector<56x128xf32>
    %c0_34 = arith.constant 0 : index
    %c0_35 = arith.constant 0 : index
    %58 = vector.load %arg7[%c0_34, %c0_35] : memref<1x56xf32, #tpu.memory_space<vmem>>, vector<1x56xf32>
    %cst_36 = arith.constant dense<0.000000e+00> : vector<1x128xf32>
    %59 = tpu.matmul %58, %57, %cst_36 {dimension_numbers = #tpu.dot_dimension_numbers<[1], [0], [0], [1], [0, 0, 1, 1], [], []>} : vector<1x56xf32>, vector<56x128xf32>, vector<1x128xf32> -> vector<1x128xf32>
    %c0_37 = arith.constant 0 : index
    %c0_38 = arith.constant 0 : index
    %60 = vector.load %arg8[%c0_37, %c0_38] : memref<1x1xf32, #tpu.memory_space<vmem>>, vector<1x1xf32>
    %61 = vector.broadcast %60 : vector<1x1xf32> to vector<1x128xf32>
    %62 = arith.addf %59, %61 : vector<1x128xf32>
    %c0_39 = arith.constant 0 : index
    %c0_40 = arith.constant 0 : index
    %63 = vector.load %arg9[%c0_39, %c0_40] : memref<1x128xf32, #tpu.memory_space<vmem>>, vector<1x128xf32>
    tpu.vector_store %arg9[%c0_39, %c0_40], %62 {strides = array<i32>} : memref<1x128xf32, #tpu.memory_space<vmem>>, vector<1x128xf32>,
    return
  }
  func.func @transform_0(%arg0: i32) -> (i32, i32) {
    %c0_i32 = arith.constant 0 : i32
    %c0_i32_0 = arith.constant 0 : i32
    return %c0_i32, %arg0 : i32, i32
  }
  func.func @transform_1(%arg0: i32) -> (i32, i32) {
    %c0_i32 = arith.constant 0 : i32
    %c0_i32_0 = arith.constant 0 : i32
    %c0_i32_1 = arith.constant 0 : i32
    return %c0_i32, %c0_i32_0 : i32, i32
  }
  func.func @transform_2(%arg0: i32) -> (i32, i32) {
    %c0_i32 = arith.constant 0 : i32
    %c0_i32_0 = arith.constant 0 : i32
    %c0_i32_1 = arith.constant 0 : i32
    return %c0_i32, %c0_i32_0 : i32, i32
  }
  func.func @transform_3(%arg0: i32) -> (i32, i32) {
    %c0_i32 = arith.constant 0 : i32
    %c0_i32_0 = arith.constant 0 : i32
    %c0_i32_1 = arith.constant 0 : i32
    return %c0_i32, %c0_i32_0 : i32, i32
  }
  func.func @transform_4(%arg0: i32) -> (i32, i32, i32) {
    %c0_i32 = arith.constant 0 : i32
    %c0_i32_0 = arith.constant 0 : i32
    %c0_i32_1 = arith.constant 0 : i32
    %c0_i32_2 = arith.constant 0 : i32
    return %c0_i32, %c0_i32_0, %c0_i32_1 : i32, i32, i32
  }
  func.func @transform_5(%arg0: i32) -> (i32, i32, i32) {
    %c0_i32 = arith.constant 0 : i32
    %c0_i32_0 = arith.constant 0 : i32
    %c0_i32_1 = arith.constant 0 : i32
    %c0_i32_2 = arith.constant 0 : i32
    return %c0_i32, %c0_i32_0, %c0_i32_1 : i32, i32, i32
  }
  func.func @transform_6(%arg0: i32) -> (i32, i32) {
    %c0_i32 = arith.constant 0 : i32
    %c0_i32_0 = arith.constant 0 : i32
    %c0_i32_1 = arith.constant 0 : i32
    return %c0_i32, %c0_i32_0 : i32, i32
  }
  func.func @transform_7(%arg0: i32) -> (i32, i32) {
    %c0_i32 = arith.constant 0 : i32
    %c0_i32_0 = arith.constant 0 : i32
    %c0_i32_1 = arith.constant 0 : i32
    return %c0_i32, %c0_i32_0 : i32, i32
  }
  func.func @transform_8(%arg0: i32) -> (i32, i32) {
    %c0_i32 = arith.constant 0 : i32
    %c0_i32_0 = arith.constant 0 : i32
    return %c0_i32, %arg0 : i32, i32
  }
}

</mosaic_0001>

<llo_original>
// kernel: modified_mlp_pallas.1
$region0: #{modified_mlp_pallas.1}
  #allocation0 [shape = 'u32[]', space=smem, size = 0x4, offset = 0x4, fixed_abs, tag = 'smem constant byte address 0x4 - core index']
  #allocation1 [shape = 'u32[72,128]{1,0:T(1,128)}', space=vmem, size = 0x9000, scoped, tag = 'internal scratch']
  #allocation2 [shape = 'f32[1,1]{1,0:T(1,128)S(1)}', space=vmem, size = 0x200, scoped, tag = 'scoped memory for modified_mlp_pallas.1']
  %s0 = inlined_call_operand.vmem [shape: f32[2,256], index: 0, kind: input, shape index: {}]
  %s1 = inlined_call_operand.vmem [shape: f32[11,1], index: 1, kind: input, shape index: {}]
  %s2 = inlined_call_operand.vmem [shape: f32[11,1], index: 2, kind: input, shape index: {}]
  %s3 = inlined_call_operand.vmem [shape: f32[168,12], index: 3, kind: input, shape index: {}]
  %s4 = inlined_call_operand.vmem [shape: f32[4,56,56], index: 4, kind: input, shape index: {}]
  %s5 = inlined_call_operand.vmem [shape: f32[4,56,1], index: 5, kind: input, shape index: {}]
  %s6 = inlined_call_operand.vmem [shape: f32[1,56], index: 6, kind: input, shape index: {}]
  %s7 = inlined_call_operand.<no memory space> [shape: f32[1,1], index: 7, kind: input, shape index: {}]
  %s8 = inlined_call_operand.hbm [shape: f32[1,256], index: 8, kind: output, shape index: {}]
  %s9 = sld [smem:[#allocation0]]
  $region65: #{modified_mlp_pallas.1} parent=0
    _
  %s11 = ssub.s32 1, %s9
  %s12 = scalar_select 0, %s11, %s9
  %v13 = vstv %s7
  %14 = vst [vmem:[#allocation2] sm:$0x1] %v13
  $region1: #{modified_mlp_pallas.1} parent=0
    #allocation3 [shape = 'u8[1024]{0}', space=vmem, size = 0x400, scoped, tag = 'output window, operand 0']
    #allocation4 [shape = 's32[2]{0}', space=sflag, size = 0x8, scoped, tag = 'scoped memory for modified_mlp_pallas.1']
    %15 = vsyncpa [#allocation4], 0
    %s16 = scalar_lea.sflag [#allocation4], 1
    %17 = vsyncpa %s16, 0
    loop: start=0, step=1, limit=4
    $region2: #{modified_mlp_pallas.1} parent=1 // loop_pre_header
      _
    $region3: #{modified_mlp_pallas.1} parent=1 // loop_header
      %s19 = sphi 0, %s23
      %p20 = scmp.ge.s32.totalorder %s19, 4
      %s29 = sphi 0, %s31
      %s32 = sphi 0, %s29
      %s33 = sphi 0, %s32
      %s49 = sphi 0, %s33
      %s53 = sphi 0, %s53
      %s55 = sphi 0, %s53
      %s56 = sphi 0, %s55
      %s70 = sphi 0, %s56
      %s74 = sphi 0, %s74
      %s76 = sphi 0, %s74
      %s77 = sphi 0, %s76
      %s91 = sphi 0, %s77
      %s95 = sphi 0, %s95
      %s97 = sphi 0, %s95
      %s98 = sphi 0, %s97
      %s112 = sphi 0, %s98
      %s116 = sphi 0, %s116
      %s118 = sphi 0, %s116
      %s119 = sphi 0, %s118
      %s133 = sphi 0, %s119
      %s137 = sphi 0, %s137
      %s139 = sphi 0, %s137
      %s140 = sphi 0, %s139
      %s154 = sphi 0, %s140
      %s158 = sphi 0, %s158
      %s160 = sphi 0, %s158
      %s161 = sphi 0, %s160
      %s175 = sphi 0, %s161
      %s179 = sphi 0, %s179
      %s181 = sphi 0, %s179
      %s182 = sphi 0, %s181
      %s196 = sphi 0, %s182
      %s202 = sphi 0, %s204
      %s205 = sphi 0, %s202
      %s206 = sphi 0, %s205
      %s222 = sphi 0, %s206
    $region4: #{modified_mlp_pallas.1} parent=1 // loop_header_branch
      %22 = sbr.rel (%p20) target = $region8
    $region5: #{modified_mlp_pallas.1} parent=1 // loop_body
      %s24 = ssub.s32 %s19, 1
      %s25 = ssub.s32 %s19, 2
      %s26 = sadd.s32 %s19, 1
      %s27 = ssub.s32 %s19, %s26
      %p28 = scmp.eq.s32.totalorder %s27, 0
      %s30 = sadd.s32 %s29, 1
      %s31 = scalar_select %p28, %s29, %s30
      %p34 = pneg %p28
      %p35 = scmp.eq.s32.totalorder %s19, 1
      %p36 = por %p34, %p35
      %p37 = scmp.ne.s32.totalorder %s29, %s32
      %p38 = scmp.eq.s32.totalorder %s19, 0
      %p39 = por %p37, %p38
      %p40 = scmp.ne.s32.totalorder %s29, %s32
      %p41 = scmp.eq.s32.totalorder %s24, 1
      %p42 = por %p40, %p41
      %p43 = scmp.ne.s32.totalorder %s32, %s33
      %p44 = scmp.eq.s32.totalorder %s24, 0
      %p45 = por %p43, %p44
      %p46 = scmp.ne.s32.totalorder %s32, %s33
      %p47 = scmp.eq.s32.totalorder %s25, 1
      %p48 = por %p46, %p47
      %p50 = scmp.ne.s32.totalorder %s33, %s49
      %p51 = scmp.eq.s32.totalorder %s25, 0
      %p52 = por %p50, %p51
      %s54 = sadd.s32 %s53, 1
      %p57 = scmp.eq.s32.totalorder %s19, 1
      %p58 = scmp.ne.s32.totalorder %s53, %s55
      %p59 = scmp.eq.s32.totalorder %s19, 0
      %p60 = por %p58, %p59
      %p61 = scmp.ne.s32.totalorder %s53, %s55
      %p62 = scmp.eq.s32.totalorder %s24, 1
      %p63 = por %p61, %p62
      %p64 = scmp.ne.s32.totalorder %s55, %s56
      %p65 = scmp.eq.s32.totalorder %s24, 0
      %p66 = por %p64, %p65
      %p67 = scmp.ne.s32.totalorder %s55, %s56
      %p68 = scmp.eq.s32.totalorder %s25, 1
      %p69 = por %p67, %p68
      %p71 = scmp.ne.s32.totalorder %s56, %s70
      %p72 = scmp.eq.s32.totalorder %s25, 0
      %p73 = por %p71, %p72
      %s75 = sadd.s32 %s74, 1
      %p78 = scmp.eq.s32.totalorder %s19, 1
      %p79 = scmp.ne.s32.totalorder %s74, %s76
      %p80 = scmp.eq.s32.totalorder %s19, 0
      %p81 = por %p79, %p80
      %p82 = scmp.ne.s32.totalorder %s74, %s76
      %p83 = scmp.eq.s32.totalorder %s24, 1
      %p84 = por %p82, %p83
      %p85 = scmp.ne.s32.totalorder %s76, %s77
      %p86 = scmp.eq.s32.totalorder %s24, 0
      %p87 = por %p85, %p86
      %p88 = scmp.ne.s32.totalorder %s76, %s77
      %p89 = scmp.eq.s32.totalorder %s25, 1
      %p90 = por %p88, %p89
      %p92 = scmp.ne.s32.totalorder %s77, %s91
      %p93 = scmp.eq.s32.totalorder %s25, 0
      %p94 = por %p92, %p93
      %s96 = sadd.s32 %s95, 1
      %p99 = scmp.eq.s32.totalorder %s19, 1
      %p100 = scmp.ne.s32.totalorder %s95, %s97
      %p101 = scmp.eq.s32.totalorder %s19, 0
      %p102 = por %p100, %p101
      %p103 = scmp.ne.s32.totalorder %s95, %s97
      %p104 = scmp.eq.s32.totalorder %s24, 1
      %p105 = por %p103, %p104
      %p106 = scmp.ne.s32.totalorder %s97, %s98
      %p107 = scmp.eq.s32.totalorder %s24, 0
      %p108 = por %p106, %p107
      %p109 = scmp.ne.s32.totalorder %s97, %s98
      %p110 = scmp.eq.s32.totalorder %s25, 1
      %p111 = por %p109, %p110
      %p113 = scmp.ne.s32.totalorder %s98, %s112
      %p114 = scmp.eq.s32.totalorder %s25, 0
      %p115 = por %p113, %p114
      %s117 = sadd.s32 %s116, 1
      %p120 = scmp.eq.s32.totalorder %s19, 1
      %p121 = scmp.ne.s32.totalorder %s116, %s118
      %p122 = scmp.eq.s32.totalorder %s19, 0
      %p123 = por %p121, %p122
      %p124 = scmp.ne.s32.totalorder %s116, %s118
      %p125 = scmp.eq.s32.totalorder %s24, 1
      %p126 = por %p124, %p125
      %p127 = scmp.ne.s32.totalorder %s118, %s119
      %p128 = scmp.eq.s32.totalorder %s24, 0
      %p129 = por %p127, %p128
      %p130 = scmp.ne.s32.totalorder %s118, %s119
      %p131 = scmp.eq.s32.totalorder %s25, 1
      %p132 = por %p130, %p131
      %p134 = scmp.ne.s32.totalorder %s119, %s133
      %p135 = scmp.eq.s32.totalorder %s25, 0
      %p136 = por %p134, %p135
      %s138 = sadd.s32 %s137, 1
      %p141 = scmp.eq.s32.totalorder %s19, 1
      %p142 = scmp.ne.s32.totalorder %s137, %s139
      %p143 = scmp.eq.s32.totalorder %s19, 0
      %p144 = por %p142, %p143
      %p145 = scmp.ne.s32.totalorder %s137, %s139
      %p146 = scmp.eq.s32.totalorder %s24, 1
      %p147 = por %p145, %p146
      %p148 = scmp.ne.s32.totalorder %s139, %s140
      %p149 = scmp.eq.s32.totalorder %s24, 0
      %p150 = por %p148, %p149
      %p151 = scmp.ne.s32.totalorder %s139, %s140
      %p152 = scmp.eq.s32.totalorder %s25, 1
      %p153 = por %p151, %p152
      %p155 = scmp.ne.s32.totalorder %s140, %s154
      %p156 = scmp.eq.s32.totalorder %s25, 0
      %p157 = por %p155, %p156
      %s159 = sadd.s32 %s158, 1
      %p162 = scmp.eq.s32.totalorder %s19, 1
      %p163 = scmp.ne.s32.totalorder %s158, %s160
      %p164 = scmp.eq.s32.totalorder %s19, 0
      %p165 = por %p163, %p164
      %p166 = scmp.ne.s32.totalorder %s158, %s160
      %p167 = scmp.eq.s32.totalorder %s24, 1
      %p168 = por %p166, %p167
      %p169 = scmp.ne.s32.totalorder %s160, %s161
      %p170 = scmp.eq.s32.totalorder %s24, 0
      %p171 = por %p169, %p170
      %p172 = scmp.ne.s32.totalorder %s160, %s161
      %p173 = scmp.eq.s32.totalorder %s25, 1
      %p174 = por %p172, %p173
      %p176 = scmp.ne.s32.totalorder %s161, %s175
      %p177 = scmp.eq.s32.totalorder %s25, 0
      %p178 = por %p176, %p177
      %s180 = sadd.s32 %s179, 1
      %p183 = scmp.eq.s32.totalorder %s19, 1
      %p184 = scmp.ne.s32.totalorder %s179, %s181
      %p185 = scmp.eq.s32.totalorder %s19, 0
      %p186 = por %p184, %p185
      %p187 = scmp.ne.s32.totalorder %s179, %s181
      %p188 = scmp.eq.s32.totalorder %s24, 1
      %p189 = por %p187, %p188
      %p190 = scmp.ne.s32.totalorder %s181, %s182
      %p191 = scmp.eq.s32.totalorder %s24, 0
      %p192 = por %p190, %p191
      %p193 = scmp.ne.s32.totalorder %s181, %s182
      %p194 = scmp.eq.s32.totalorder %s25, 1
      %p195 = por %p193, %p194
      %p197 = scmp.ne.s32.totalorder %s182, %s196
      %p198 = scmp.eq.s32.totalorder %s25, 0
      %p199 = por %p197, %p198
      %s200 = ssub.s32 %s19, %s26
      %p201 = scmp.eq.s32.totalorder %s200, 0
      %s203 = sadd.s32 %s202, 1
      %s204 = scalar_select %p201, %s202, %s203
      %p207 = pneg %p201
      %p208 = scmp.eq.s32.totalorder %s19, 1
      %p209 = por %p207, %p208
      %p210 = scmp.ne.s32.totalorder %s202, %s205
      %p211 = scmp.eq.s32.totalorder %s19, 0
      %p212 = por %p210, %p211
      %p213 = scmp.ne.s32.totalorder %s202, %s205
      %p214 = scmp.eq.s32.totalorder %s24, 1
      %p215 = por %p213, %p214
      %p216 = scmp.ne.s32.totalorder %s205, %s206
      %p217 = scmp.eq.s32.totalorder %s24, 0
      %p218 = por %p216, %p217
      %p219 = scmp.ne.s32.totalorder %s205, %s206
      %p220 = scmp.eq.s32.totalorder %s25, 1
      %p221 = por %p219, %p220
      %p223 = scmp.ne.s32.totalorder %s206, %s222
      %p224 = scmp.eq.s32.totalorder %s25, 0
      %p225 = por %p223, %p224
      %p226 = scmp.le.s32.totalorder 1, %s19
      %p227 = scmp.lt.s32.totalorder %s19, 3
      %p228 = pnand %p226, %p227
      %p229 = pneg %p228
      // Predicated region
      $region9: #{modified_mlp_pallas.1} parent=5 // pred_check
        _
      $region10: #{modified_mlp_pallas.1} parent=5 // pred_check_branch
        %231 = sbr.rel (%p228) target = $region12
      $region11: #{modified_mlp_pallas.1} parent=5 // pred_region
        %s232 = ssub.s32 %s19, 1
        // Predicated region
        $region13: #{modified_mlp_pallas.1} parent=11 // pred_check
          %p233 = pneg %p66
        $region14: #{modified_mlp_pallas.1} parent=11 // pred_check_branch
          %235 = sbr.rel (%p233) target = $region16
        $region15: #{modified_mlp_pallas.1} parent=11 // pred_region
          _
        $region16: #{modified_mlp_pallas.1} parent=11 // pred_fallthru
          _
        // Predicated region
        $region17: #{modified_mlp_pallas.1} parent=11 // pred_check
          %p236 = pneg %p87
        $region18: #{modified_mlp_pallas.1} parent=11 // pred_check_branch
          %238 = sbr.rel (%p236) target = $region20
        $region19: #{modified_mlp_pallas.1} parent=11 // pred_region
          _
        $region20: #{modified_mlp_pallas.1} parent=11 // pred_fallthru
          _
        // Predicated region
        $region21: #{modified_mlp_pallas.1} parent=11 // pred_check
          %p239 = pneg %p108
        $region22: #{modified_mlp_pallas.1} parent=11 // pred_check_branch
          %241 = sbr.rel (%p239) target = $region24
        $region23: #{modified_mlp_pallas.1} parent=11 // pred_region
          _
        $region24: #{modified_mlp_pallas.1} parent=11 // pred_fallthru
          _
        // Predicated region
        $region25: #{modified_mlp_pallas.1} parent=11 // pred_check
          %p242 = pneg %p129
        $region26: #{modified_mlp_pallas.1} parent=11 // pred_check_branch
          %244 = sbr.rel (%p242) target = $region28
        $region27: #{modified_mlp_pallas.1} parent=11 // pred_region
          _
        $region28: #{modified_mlp_pallas.1} parent=11 // pred_fallthru
          _
        // Predicated region
        $region29: #{modified_mlp_pallas.1} parent=11 // pred_check
          %p245 = pneg %p150
        $region30: #{modified_mlp_pallas.1} parent=11 // pred_check_branch
          %247 = sbr.rel (%p245) target = $region32
        $region31: #{modified_mlp_pallas.1} parent=11 // pred_region
          _
        $region32: #{modified_mlp_pallas.1} parent=11 // pred_fallthru
          _
        // Predicated region
        $region33: #{modified_mlp_pallas.1} parent=11 // pred_check
          %p248 = pneg %p171
        $region34: #{modified_mlp_pallas.1} parent=11 // pred_check_branch
          %250 = sbr.rel (%p248) target = $region36
        $region35: #{modified_mlp_pallas.1} parent=11 // pred_region
          _
        $region36: #{modified_mlp_pallas.1} parent=11 // pred_fallthru
          _
        // Predicated region
        $region37: #{modified_mlp_pallas.1} parent=11 // pred_check
          %p251 = pneg %p192
        $region38: #{modified_mlp_pallas.1} parent=11 // pred_check_branch
          %253 = sbr.rel (%p251) target = $region40
        $region39: #{modified_mlp_pallas.1} parent=11 // pred_region
          _
        $region40: #{modified_mlp_pallas.1} parent=11 // pred_fallthru
          _
      $region12: #{modified_mlp_pallas.1} parent=5 // pred_fallthru
        _
      %p254 = scmp.lt.s32.totalorder %s19, 2
      // Predicated region
      $region41: #{modified_mlp_pallas.1} parent=5 // pred_check
        %p255 = pneg %p254
      $region42: #{modified_mlp_pallas.1} parent=5 // pred_check_branch
        %257 = sbr.rel (%p255) target = $region44
      $region43: #{modified_mlp_pallas.1} parent=5 // pred_region
        // Predicated region
        $region45: #{modified_mlp_pallas.1} parent=43 // pred_check
          %p258 = pneg %p39
        $region46: #{modified_mlp_pallas.1} parent=43 // pred_check_branch
          %260 = sbr.rel (%p258) target = $region48
        $region47: #{modified_mlp_pallas.1} parent=43 // pred_region
          %p261 = scmp.lt.s32.totalorder %s19, 1
          %s262 = scalar_select %p261, %s19, 1
          %s263 = smul.addr %s262, 2
          %s264 = scalar_lea.vmem %s0, %s263
        $region48: #{modified_mlp_pallas.1} parent=43 // pred_fallthru
          _
      $region44: #{modified_mlp_pallas.1} parent=5 // pred_fallthru
        _
      %p265 = scmp.le.s32.totalorder 1, %s19
      %p266 = scmp.lt.s32.totalorder %s19, 3
      %p267 = pnand %p265, %p266
      %p268 = pneg %p267
      // Predicated region
      $region49: #{modified_mlp_pallas.1} parent=5 // pred_check
        _
      $region50: #{modified_mlp_pallas.1} parent=5 // pred_check_branch
        %270 = sbr.rel (%p267) target = $region52
      $region51: #{modified_mlp_pallas.1} parent=5 // pred_region
        %s271 = ssub.s32 %s19, 1
        %p272 = scmp.lt.s32.totalorder %s24, 1
        %s273 = scalar_select %p272, %s24, 1
        %s274 = smul.addr %s273, 2
        %s275 = scalar_lea.vmem %s0, %s274
        %p276 = pneg %p45
        %p277 = pneg %p42
        %p278 = pneg %p66
        %p279 = pneg %p63
        %p280 = pneg %p87
        %p281 = pneg %p84
        %p282 = pneg %p108
        %p283 = pneg %p105
        %p284 = pneg %p129
        %p285 = pneg %p126
        %p286 = pneg %p150
        %p287 = pneg %p147
        %p288 = pneg %p171
        %p289 = pneg %p168
        %p290 = pneg %p192
        %p291 = pneg %p189
        %p292 = pneg %p218
        %p293 = pneg %p215
        %s294 = sand.u32 %s205, 1
        %s295 = scalar_lea.sflag [#allocation4], %s294
        %s296 = sand.u32 %s205, 1
        %s297 = scalar_lea.vmem [#allocation3], %s296
        %p298 = scmp.lt.s32.totalorder %s24, 1
        %s299 = scalar_select %p298, %s24, 1
        %s300 = smul.addr %s299, 2
        %s301 = scalar_lea.vmem %s0, %s300
        %v302 = vld [vmem:[%s301] sm:$0x1]
        %v303 = vld [vmem:[%s301 + $0x1] sm:$0x1]
        %v304 = vld [vmem:[%s1] sm:$0xff]
        %v305 = vld [vmem:[%s1 + $0x8] sm:$0x7]
        %307 = vset.pattern.permute.xlu0 0
        %308 = vperm.xlu0 %307, %v304
        %v309 = vpop.permute.xlu0 %308
        %312 = vset.pattern.permute.xlu0 0
        %313 = vperm.xlu0 %312, %v305
        %v314 = vpop.permute.xlu0 %313
        %v316 = vperm.slane %v303, 0
        %v317 = vmul.f32 %v309, %v316
        %v318 = vmul.f32 %v314, %v316
        %v319 = vld [vmem:[%s2] sm:$0xff]
        %v320 = vld [vmem:[%s2 + $0x8] sm:$0x7]
        %322 = vset.pattern.permute.xlu0 0
        %323 = vperm.xlu0 %322, %v319
        %v324 = vpop.permute.xlu0 %323
        %327 = vset.pattern.permute.xlu0 0
        %328 = vperm.xlu0 %327, %v320
        %v329 = vpop.permute.xlu0 %328
        %v331 = vadd.f32 %v317, %v324
        %v332 = vadd.f32 %v318, %v329
        %v333 = vand.u32 2147483647, %v331
        %vm334 = vcmp.le.f32.partialorder %v333, 0.7853982
        %vm335 = vcmp.lt.s32.totalorder %v331, 0
        %v336 = vand.u32 %v331, 2139095040
        %v337 = vshrl.u32 %v336, 23
        %v338 = vsub.s32 %v337, 127
        %v339 = vand.u32 2147483647, %v331
        %v340 = vand.u32 %v339, 8388607
        %v341 = vor.u32 %v340, 8388608
        %v342 = vsub.s32 0, %v341
        %v343 = vadd.s32 %v338, 1
        %vm344 = vcmp.gt.s32.totalorder %v343, 0
        %v345 = vsel %vm344, %v343, 0
        %v346 = vshrl.u32 %v345, 5
        %v347 = vand.u32 %v345, 31
        %v348 = vsub.s32 32, %v347
        %v349 = vshrl.u32 683565275, %v348
        %v350 = vshll.u32 683565275, %v347
        %v351 = vshrl.u32 2475754826, %v348
        %v352 = vor.u32 %v350, %v351
        %v353 = vshll.u32 2475754826, %v347
        %v354 = vshrl.u32 2131351028, %v348
        %v355 = vor.u32 %v353, %v354
        %v356 = vshll.u32 2131351028, %v347
        %v357 = vshrl.u32 2102212464, %v348
        %v358 = vor.u32 %v356, %v357
        %v359 = vshll.u32 2102212464, %v347
        %v360 = vshrl.u32 920167782, %v348
        %v361 = vor.u32 %v359, %v360
        %v362 = vshll.u32 920167782, %v347
        %v363 = vshrl.u32 1326507024, %v348
        %v364 = vor.u32 %v362, %v363
        %vm365 = vcmp.lt.s32.totalorder %v346, 1
        %vm366 = vcmp.lt.s32.totalorder %v346, 2
        %vm367 = vcmp.lt.s32.totalorder %v346, 3
        %vm368 = vcmp.lt.s32.totalorder %v346, 4
        %v369 = vsel %vm365, %v349, %v352
        %v370 = vsel %vm368, %v358, 2102212464
        %v371 = vsel %vm367, %v355, %v370
        %v372 = vsel %vm366, %v369, %v371
        %v373 = vsel %vm365, %v352, %v355
        %v374 = vsel %vm368, %v361, 920167782
        %v375 = vsel %vm367, %v358, %v374
        %v376 = vsel %vm366, %v373, %v375
        %v377 = vsel %vm365, %v355, %v358
        %v378 = vsel %vm368, %v364, 1326507024
        %v379 = vsel %vm367, %v361, %v378
        %v380 = vsel %vm366, %v377, %v379
        %v381 = vshll.u32 %v341, 8
        %v382 = vand.u32 %v381, 65535
        %v383 = vshrl.u32 %v381, 16
        %v384 = vand.u32 %v380, 65535
        %v385 = vshrl.u32 %v380, 16
        %v386 = vmul.u32 %v382, %v384
        %v387 = vmul.u32 %v382, %v385
        %v388 = vmul.u32 %v383, %v384
        %v389 = vmul.u32 %v383, %v385
        %v390 = vshll.u32 %v387, 16
        %v391 = vshrl.u32 %v387, 16
        %v392 = vshll.u32 %v388, 16
        %v393 = vshrl.u32 %v388, 16
        %vm394 = vc.u32 %v386, %v390
        %v395 = vsel %vm394, 1, 0
        %v396 = vadd.s32 %v386, %v390
        %v397 = vadd.s32 %v389, %v395
        %vm398 = vc.u32 %v396, %v392
        %v399 = vsel %vm398, 1, 0
        %v400 = vadd.s32 %v396, %v392
        %v401 = vadd.s32 %v397, %v399
        %v402 = vadd.s32 %v401, %v391
        %v403 = vadd.s32 %v402, %v393
        %v404 = vand.u32 %v381, 65535
        %v405 = vshrl.u32 %v381, 16
        %v406 = vand.u32 %v376, 65535
        %v407 = vshrl.u32 %v376, 16
        %v408 = vmul.u32 %v404, %v406
        %v409 = vmul.u32 %v404, %v407
        %v410 = vmul.u32 %v405, %v406
        %v411 = vmul.u32 %v405, %v407
        %v412 = vshll.u32 %v409, 16
        %v413 = vshrl.u32 %v409, 16
        %v414 = vshll.u32 %v410, 16
        %v415 = vshrl.u32 %v410, 16
        %vm416 = vc.u32 %v408, %v412
        %v417 = vsel %vm416, 1, 0
        %v418 = vadd.s32 %v408, %v412
        %v419 = vadd.s32 %v411, %v417
        %vm420 = vc.u32 %v418, %v414
        %v421 = vsel %vm420, 1, 0
        %v422 = vadd.s32 %v418, %v414
        %v423 = vadd.s32 %v419, %v421
        %v424 = vadd.s32 %v423, %v413
        %v425 = vadd.s32 %v424, %v415
        %v426 = vmul.u32 %v381, %v372
        %v427 = vadd.s32 %v403, %v422
        %vm428 = vc.u32 %v403, %v422
        %v429 = vadd.s32 %v425, 1
        %v430 = vsel %vm428, %v429, %v425
        %v431 = vadd.s32 %v426, %v430
        %v432 = vadd.s32 %v431, 536870912
        %v433 = vshrl.u32 %v432, 30
        %v434 = vshll.u32 %v433, 30
        %v435 = vsub.s32 %v431, %v434
        %vm436 = vcmp.lt.s32.totalorder %v435, 0
        %v437 = vsub.s32 0, %v435
        %v438 = vsel %vm436, %v437, %v435
        %v439 = vclz %v438
        %v440 = vsub.s32 %v439, 2
        %vm441 = vcmp.gt.s32.totalorder 0, %v440
        %v442 = vsel %vm441, 0, %v440
        %v443 = vsub.s32 32, %v442
        %v444 = vshll.u32 %v435, %v442
        %v445 = vshrl.u32 %v427, %v443
        %v446 = vor.u32 %v444, %v445
        %v447 = vsub.s32 4294967266, %v442
        %v448 = vadd.s32 %v447, 127
        %v449 = vshll.u32 %v448, 23
        %v450 = vor.u32 4788187, %v449
        %v451 = vand.u32 2147483647, %v450
        %v453 = vcvt.s32.f32 %v446
        %v454 = vmul.f32 %v453, %v451
        %v455 = vxor.u32 %v454, 2147483648
        %v456 = vsel %vm335, %v455, %v454
        %v457 = vsub.s32 4, %v433
        %v458 = vsel %vm335, %v457, %v433
        %v459 = vsel %vm334, %v331, %v456
        %v460 = vsel %vm334, 0, %v458
        %v461 = vmul.f32 %v459, %v459
        %v462 = vmul.f32 %v461, -0.001358992
        %v463 = vadd.f32 %v462, 0.041655596
        %v464 = vmul.f32 %v461, %v463
        %v465 = vadd.f32 %v464, -0.4999988
        %v466 = vmul.f32 %v461, %v465
        %v467 = vadd.f32 1.0, %v466
        %v468 = vmul.f32 %v459, %v459
        %v469 = vmul.f32 %v468, -0.00019511016
        %v470 = vadd.f32 %v469, 0.008332121
        %v471 = vmul.f32 %v468, %v470
        %v472 = vadd.f32 %v471, -0.16666654
        %v473 = vmul.f32 %v468, %v472
        %v474 = vadd.f32 %v473, 1.0
        %v475 = vmul.f32 %v474, %v459
        %vm476 = vweird.f32 %v331
        %v477 = vand.u32 %v460, 3
        %vm478 = vcmp.lt.s32.totalorder %v477, 2
        %vm479 = vcmp.eq.s32.totalorder %v477, 0
        %v480 = vxor.u32 %v475, 2147483648
        %v481 = vsel %vm479, %v467, %v480
        %vm482 = vcmp.eq.s32.totalorder %v477, 2
        %v483 = vxor.u32 %v467, 2147483648
        %v484 = vsel %vm482, %v483, %v475
        %v485 = vsel %vm478, %v481, %v484
        %v486 = vsel %vm476, nan, %v485
        %v487 = vand.u32 2147483647, %v332
        %vm488 = vcmp.le.f32.partialorder %v487, 0.7853982
        %vm489 = vcmp.lt.s32.totalorder %v332, 0
        %v490 = vand.u32 %v332, 2139095040
        %v491 = vshrl.u32 %v490, 23
        %v492 = vsub.s32 %v491, 127
        %v493 = vand.u32 2147483647, %v332
        %v494 = vand.u32 %v493, 8388607
        %v495 = vor.u32 %v494, 8388608
        %v496 = vsub.s32 0, %v495
        %v497 = vadd.s32 %v492, 1
        %vm498 = vcmp.gt.s32.totalorder %v497, 0
        %v499 = vsel %vm498, %v497, 0
        %v500 = vshrl.u32 %v499, 5
        %v501 = vand.u32 %v499, 31
        %v502 = vsub.s32 32, %v501
        %v503 = vshrl.u32 683565275, %v502
        %v504 = vshll.u32 683565275, %v501
        %v505 = vshrl.u32 2475754826, %v502
        %v506 = vor.u32 %v504, %v505
        %v507 = vshll.u32 2475754826, %v501
        %v508 = vshrl.u32 2131351028, %v502
        %v509 = vor.u32 %v507, %v508
        %v510 = vshll.u32 2131351028, %v501
        %v511 = vshrl.u32 2102212464, %v502
        %v512 = vor.u32 %v510, %v511
        %v513 = vshll.u32 2102212464, %v501
        %v514 = vshrl.u32 920167782, %v502
        %v515 = vor.u32 %v513, %v514
        %v516 = vshll.u32 920167782, %v501
        %v517 = vshrl.u32 1326507024, %v502
        %v518 = vor.u32 %v516, %v517
        %vm519 = vcmp.lt.s32.totalorder %v500, 1
        %vm520 = vcmp.lt.s32.totalorder %v500, 2
        %vm521 = vcmp.lt.s32.totalorder %v500, 3
        %vm522 = vcmp.lt.s32.totalorder %v500, 4
        %v523 = vsel %vm519, %v503, %v506
        %v524 = vsel %vm522, %v512, 2102212464
        %v525 = vsel %vm521, %v509, %v524
        %v526 = vsel %vm520, %v523, %v525
        %v527 = vsel %vm519, %v506, %v509
        %v528 = vsel %vm522, %v515, 920167782
        %v529 = vsel %vm521, %v512, %v528
        %v530 = vsel %vm520, %v527, %v529
        %v531 = vsel %vm519, %v509, %v512
        %v532 = vsel %vm522, %v518, 1326507024
        %v533 = vsel %vm521, %v515, %v532
        %v534 = vsel %vm520, %v531, %v533
        %v535 = vshll.u32 %v495, 8
        %v536 = vand.u32 %v535, 65535
        %v537 = vshrl.u32 %v535, 16
        %v538 = vand.u32 %v534, 65535
        %v539 = vshrl.u32 %v534, 16
        %v540 = vmul.u32 %v536, %v538
        %v541 = vmul.u32 %v536, %v539
        %v542 = vmul.u32 %v537, %v538
        %v543 = vmul.u32 %v537, %v539
        %v544 = vshll.u32 %v541, 16
        %v545 = vshrl.u32 %v541, 16
        %v546 = vshll.u32 %v542, 16
        %v547 = vshrl.u32 %v542, 16
        %vm548 = vc.u32 %v540, %v544
        %v549 = vsel %vm548, 1, 0
        %v550 = vadd.s32 %v540, %v544
        %v551 = vadd.s32 %v543, %v549
        %vm552 = vc.u32 %v550, %v546
        %v553 = vsel %vm552, 1, 0
        %v554 = vadd.s32 %v550, %v546
        %v555 = vadd.s32 %v551, %v553
        %v556 = vadd.s32 %v555, %v545
        %v557 = vadd.s32 %v556, %v547
        %v558 = vand.u32 %v535, 65535
        %v559 = vshrl.u32 %v535, 16
        %v560 = vand.u32 %v530, 65535
        %v561 = vshrl.u32 %v530, 16
        %v562 = vmul.u32 %v558, %v560
        %v563 = vmul.u32 %v558, %v561
        %v564 = vmul.u32 %v559, %v560
        %v565 = vmul.u32 %v559, %v561
        %v566 = vshll.u32 %v563, 16
        %v567 = vshrl.u32 %v563, 16
        %v568 = vshll.u32 %v564, 16
        %v569 = vshrl.u32 %v564, 16
        %vm570 = vc.u32 %v562, %v566
        %v571 = vsel %vm570, 1, 0
        %v572 = vadd.s32 %v562, %v566
        %v573 = vadd.s32 %v565, %v571
        %vm574 = vc.u32 %v572, %v568
        %v575 = vsel %vm574, 1, 0
        %v576 = vadd.s32 %v572, %v568
        %v577 = vadd.s32 %v573, %v575
        %v578 = vadd.s32 %v577, %v567
        %v579 = vadd.s32 %v578, %v569
        %v580 = vmul.u32 %v535, %v526
        %v581 = vadd.s32 %v557, %v576
        %vm582 = vc.u32 %v557, %v576
        %v583 = vadd.s32 %v579, 1
        %v584 = vsel %vm582, %v583, %v579
        %v585 = vadd.s32 %v580, %v584
        %v586 = vadd.s32 %v585, 536870912
        %v587 = vshrl.u32 %v586, 30
        %v588 = vshll.u32 %v587, 30
        %v589 = vsub.s32 %v585, %v588
        %vm590 = vcmp.lt.s32.totalorder %v589, 0
        %v591 = vsub.s32 0, %v589
        %v592 = vsel %vm590, %v591, %v589
        %v593 = vclz %v592
        %v594 = vsub.s32 %v593, 2
        %vm595 = vcmp.gt.s32.totalorder 0, %v594
        %v596 = vsel %vm595, 0, %v594
        %v597 = vsub.s32 32, %v596
        %v598 = vshll.u32 %v589, %v596
        %v599 = vshrl.u32 %v581, %v597
        %v600 = vor.u32 %v598, %v599
        %v601 = vsub.s32 4294967266, %v596
        %v602 = vadd.s32 %v601, 127
        %v603 = vshll.u32 %v602, 23
        %v604 = vor.u32 4788187, %v603
        %v605 = vand.u32 2147483647, %v604
        %v607 = vcvt.s32.f32 %v600
        %v608 = vmul.f32 %v607, %v605
        %v609 = vxor.u32 %v608, 2147483648
        %v610 = vsel %vm489, %v609, %v608
        %v611 = vsub.s32 4, %v587
        %v612 = vsel %vm489, %v611, %v587
        %v613 = vsel %vm488, %v332, %v610
        %v614 = vsel %vm488, 0, %v612
        %v615 = vmul.f32 %v613, %v613
        %v616 = vmul.f32 %v615, -0.001358992
        %v617 = vadd.f32 %v616, 0.041655596
        %v618 = vmul.f32 %v615, %v617
        %v619 = vadd.f32 %v618, -0.4999988
        %v620 = vmul.f32 %v615, %v619
        %v621 = vadd.f32 1.0, %v620
        %v622 = vmul.f32 %v613, %v613
        %v623 = vmul.f32 %v622, -0.00019511016
        %v624 = vadd.f32 %v623, 0.008332121
        %v625 = vmul.f32 %v622, %v624
        %v626 = vadd.f32 %v625, -0.16666654
        %v627 = vmul.f32 %v622, %v626
        %v628 = vadd.f32 %v627, 1.0
        %v629 = vmul.f32 %v628, %v613
        %vm630 = vweird.f32 %v332
        %v631 = vand.u32 %v614, 3
        %vm632 = vcmp.lt.s32.totalorder %v631, 2
        %vm633 = vcmp.eq.s32.totalorder %v631, 0
        %v634 = vxor.u32 %v629, 2147483648
        %v635 = vsel %vm633, %v621, %v634
        %vm636 = vcmp.eq.s32.totalorder %v631, 2
        %v637 = vxor.u32 %v621, 2147483648
        %v638 = vsel %vm636, %v637, %v629
        %v639 = vsel %vm632, %v635, %v638
        %v640 = vsel %vm630, nan, %v639
        %vm643 = vcmask 1040384
        %v644 = vrot.slane %v486, 7
        %v645 = vrot.slane %v640, 7
        %v646 = vsel %vm643, %v644, %v645
        %v648 = vsel %vm643, %v302, %v644
        %v649 = vld [vmem:[%s3] sm:$0xff]
        %v650 = vld [vmem:[%s3 + $0x8] sm:$0xff]
        %v651 = vld [vmem:[%s3 + $0x10] sm:$0xff]
        %v652 = vld [vmem:[%s3 + $0x18] sm:$0xff]
        %v653 = vld [vmem:[%s3 + $0x20] sm:$0xff]
        %v654 = vld [vmem:[%s3 + $0x28] sm:$0xff]
        %v655 = vld [vmem:[%s3 + $0x30] sm:$0xff]
        %v656 = vld [vmem:[%s3 + $0x38] sm:$0xff]
        %v657 = vld [vmem:[%s3 + $0x40] sm:$0xff]
        %v658 = vld [vmem:[%s3 + $0x48] sm:$0xff]
        %v659 = vld [vmem:[%s3 + $0x50] sm:$0xff]
        %v660 = vld [vmem:[%s3 + $0x58] sm:$0xff]
        %v661 = vld [vmem:[%s3 + $0x60] sm:$0xff]
        %v662 = vld [vmem:[%s3 + $0x68] sm:$0xff]
        %v663 = vld [vmem:[%s3 + $0x70] sm:$0xff]
        %v664 = vld [vmem:[%s3 + $0x78] sm:$0xff]
        %v665 = vld [vmem:[%s3 + $0x80] sm:$0xff]
        %v666 = vld [vmem:[%s3 + $0x88] sm:$0xff]
        %v667 = vld [vmem:[%s3 + $0x90] sm:$0xff]
        %v668 = vld [vmem:[%s3 + $0x98] sm:$0xff]
        %v669 = vld [vmem:[%s3 + $0xa0] sm:$0xff]
        %vm670 = vcmask 97280
        %v672 = vsel %vm670, %v649, 0
        %v675 = vsel %vm670, %v650, 0
        %v678 = vsel %vm670, %v651, 0
        %v681 = vsel %vm670, %v652, 0
        %v684 = vsel %vm670, %v653, 0
        %v687 = vsel %vm670, %v654, 0
        %v690 = vsel %vm670, %v655, 0
        %v693 = vsel %vm670, %v656, 0
        %v696 = vsel %vm670, %v657, 0
        %v699 = vsel %vm670, %v658, 0
        %v702 = vsel %vm670, %v659, 0
        %v705 = vsel %vm670, %v660, 0
        %v708 = vsel %vm670, %v661, 0
        %v711 = vsel %vm670, %v662, 0
        %v714 = vsel %vm670, %v663, 0
        %v717 = vsel %vm670, %v664, 0
        %v720 = vsel %vm670, %v665, 0
        %v723 = vsel %vm670, %v666, 0
        %v726 = vsel %vm670, %v667, 0
        %v729 = vsel %vm670, %v668, 0
        %v732 = vsel %vm670, %v669, 0
        %vm734 = vcmask 1043456
        %v735 = vsel %vm734, %v646, 0
        %737 = vmatpush.msra.mxu0 0.0
        %738 = vmatpush.msra.mxu0 0.0
        %739 = vmatpush.msra.mxu0 0.0
        %740 = vmatpush.msra.mxu0 0.0
        %741 = vmatpush.msra.mxu0 0.0
        %742 = vmatpush.msra.mxu0 0.0
        %743 = vmatpush.msra.mxu0 0.0
        %744 = vmatpush.msra.mxu0 0.0
        %745 = vmatpush.msra.mxu0 0.0
        %746 = vmatpush.msra.mxu0 0.0
        %747 = vmatpush.msra.mxu0 0.0
        %748 = vmatpush.msra.mxu0 0.0
        %749 = vmatpush.msra.mxu0 0.0
        %750 = vmatpush.msra.mxu0 0.0
        %751 = vmatpush.msra.mxu0 %v735
        %752 = vmatpush.msra.mxu0 %v648
        %753 = vmatmul.f32.gmra.mxu0 %v672
        %v754 = vpop.f32.mrf.mxu0
        %v755 = vadd.f32 0.0, %v754
        %756 = vmatmul.f32.gmra.mxu0 %v675
        %v757 = vpop.f32.mrf.mxu0
        %v758 = vadd.f32 0.0, %v757
        %759 = vmatmul.f32.gmra.mxu0 %v678
        %v760 = vpop.f32.mrf.mxu0
        %v761 = vadd.f32 0.0, %v760
        %762 = vmatmul.f32.gmra.mxu0 %v681
        %v763 = vpop.f32.mrf.mxu0
        %v764 = vadd.f32 0.0, %v763
        %765 = vmatmul.f32.gmra.mxu0 %v684
        %v766 = vpop.f32.mrf.mxu0
        %v767 = vadd.f32 0.0, %v766
        %768 = vmatmul.f32.gmra.mxu0 %v687
        %v769 = vpop.f32.mrf.mxu0
        %v770 = vadd.f32 0.0, %v769
        %771 = vmatmul.f32.gmra.mxu0 %v690
        %v772 = vpop.f32.mrf.mxu0
        %v773 = vadd.f32 0.0, %v772
        %774 = vmatmul.f32.gmra.mxu0 %v693
        %v775 = vpop.f32.mrf.mxu0
        %v776 = vadd.f32 0.0, %v775
        %777 = vmatmul.f32.gmra.mxu0 %v696
        %v778 = vpop.f32.mrf.mxu0
        %v779 = vadd.f32 0.0, %v778
        %780 = vmatmul.f32.gmra.mxu0 %v699
        %v781 = vpop.f32.mrf.mxu0
        %v782 = vadd.f32 0.0, %v781
        %783 = vmatmul.f32.gmra.mxu0 %v702
        %v784 = vpop.f32.mrf.mxu0
        %v785 = vadd.f32 0.0, %v784
        %786 = vmatmul.f32.gmra.mxu0 %v705
        %v787 = vpop.f32.mrf.mxu0
        %v788 = vadd.f32 0.0, %v787
        %789 = vmatmul.f32.gmra.mxu0 %v708
        %v790 = vpop.f32.mrf.mxu0
        %v791 = vadd.f32 0.0, %v790
        %792 = vmatmul.f32.gmra.mxu0 %v711
        %v793 = vpop.f32.mrf.mxu0
        %v794 = vadd.f32 0.0, %v793
        %795 = vmatmul.f32.gmra.mxu0 %v714
        %v796 = vpop.f32.mrf.mxu0
        %v797 = vadd.f32 0.0, %v796
        %798 = vmatmul.f32.gmra.mxu0 %v717
        %v799 = vpop.f32.mrf.mxu0
        %v800 = vadd.f32 0.0, %v799
        %801 = vmatmul.f32.gmra.mxu0 %v720
        %v802 = vpop.f32.mrf.mxu0
        %v803 = vadd.f32 0.0, %v802
        %804 = vmatmul.f32.gmra.mxu0 %v723
        %v805 = vpop.f32.mrf.mxu0
        %v806 = vadd.f32 0.0, %v805
        %807 = vmatmul.f32.gmra.mxu0 %v726
        %v808 = vpop.f32.mrf.mxu0
        %v809 = vadd.f32 0.0, %v808
        %810 = vmatmul.f32.gmra.mxu0 %v729
        %v811 = vpop.f32.mrf.mxu0
        %v812 = vadd.f32 0.0, %v811
        %813 = vmatmul.f32.gmra.mxu0 %v732
        %v814 = vpop.f32.mrf.mxu0
        %v815 = vadd.f32 0.0, %v814
        %816 = vdwg.mxu0
        %v817 = vtanh.pop %v755
        %v818 = vtanh.pop %v758
        %v819 = vtanh.pop %v761
        %v820 = vtanh.pop %v764
        %v821 = vtanh.pop %v767
        %v822 = vtanh.pop %v770
        %v823 = vtanh.pop %v773
        %v824 = vtanh.pop %v776
        %v825 = vtanh.pop %v779
        %v826 = vtanh.pop %v782
        %v827 = vtanh.pop %v785
        %v828 = vtanh.pop %v788
        %v829 = vtanh.pop %v791
        %v830 = vtanh.pop %v794
        %v831 = vtanh.pop %v797
        %v832 = vtanh.pop %v800
        %v833 = vtanh.pop %v803
        %v834 = vtanh.pop %v806
        %v835 = vtanh.pop %v809
        %v836 = vtanh.pop %v812
        %v837 = vtanh.pop %v815
        %v838 = vsub.f32 %v824, %v817
        %v839 = vsub.f32 %v825, %v818
        %v840 = vsub.f32 %v826, %v819
        %v841 = vsub.f32 %v827, %v820
        %v842 = vsub.f32 %v828, %v821
        %v843 = vsub.f32 %v829, %v822
        %v844 = vsub.f32 %v830, %v823
        %v845 = vld [vmem:[%s4] sm:$0xff]
        %v846 = vld [vmem:[%s4 + $0x8] sm:$0xff]
        %v847 = vld [vmem:[%s4 + $0x10] sm:$0xff]
        %v848 = vld [vmem:[%s4 + $0x18] sm:$0xff]
        %v849 = vld [vmem:[%s4 + $0x20] sm:$0xff]
        %v850 = vld [vmem:[%s4 + $0x28] sm:$0xff]
        %v851 = vld [vmem:[%s4 + $0x30] sm:$0xff]
        %v852 = vld [vmem:[%s5] sm:$0xff]
        %v853 = vld [vmem:[%s5 + $0x8] sm:$0xff]
        %v854 = vld [vmem:[%s5 + $0x10] sm:$0xff]
        %v855 = vld [vmem:[%s5 + $0x18] sm:$0xff]
        %v856 = vld [vmem:[%s5 + $0x20] sm:$0xff]
        %v857 = vld [vmem:[%s5 + $0x28] sm:$0xff]
        %v858 = vld [vmem:[%s5 + $0x30] sm:$0xff]
        %860 = vset.pattern.permute.xlu0 0
        %861 = vperm.xlu0 %860, %v852
        %v862 = vpop.permute.xlu0 %861
        %865 = vset.pattern.permute.xlu0 0
        %866 = vperm.xlu0 %865, %v853
        %v867 = vpop.permute.xlu0 %866
        %870 = vset.pattern.permute.xlu0 0
        %871 = vperm.xlu0 %870, %v854
        %v872 = vpop.permute.xlu0 %871
        %875 = vset.pattern.permute.xlu0 0
        %876 = vperm.xlu0 %875, %v855
        %v877 = vpop.permute.xlu0 %876
        %880 = vset.pattern.permute.xlu0 0
        %881 = vperm.xlu0 %880, %v856
        %v882 = vpop.permute.xlu0 %881
        %885 = vset.pattern.permute.xlu0 0
        %886 = vperm.xlu0 %885, %v857
        %v887 = vpop.permute.xlu0 %886
        %890 = vset.pattern.permute.xlu0 0
        %891 = vperm.xlu0 %890, %v858
        %v892 = vpop.permute.xlu0 %891
        %vm894 = vcmask 457728
        %v896 = vsel %vm894, %v845, 0
        %v899 = vsel %vm894, %v846, 0
        %v902 = vsel %vm894, %v847, 0
        %v905 = vsel %vm894, %v848, 0
        %v908 = vsel %vm894, %v849, 0
        %v911 = vsel %vm894, %v850, 0
        %v914 = vsel %vm894, %v851, 0
        %916 = vmatpush.msra.mxu0 0.0
        %917 = vmatpush.msra.mxu0 0.0
        %918 = vmatpush.msra.mxu0 0.0
        %919 = vmatpush.msra.mxu0 0.0
        %920 = vmatpush.msra.mxu0 0.0
        %921 = vmatpush.msra.mxu0 0.0
        %922 = vmatpush.msra.mxu0 0.0
        %923 = vmatpush.msra.mxu0 0.0
        %924 = vmatpush.msra.mxu0 0.0
        %925 = vmatpush.msra.mxu0 %v837
        %926 = vmatpush.msra.mxu0 %v836
        %927 = vmatpush.msra.mxu0 %v835
        %928 = vmatpush.msra.mxu0 %v834
        %929 = vmatpush.msra.mxu0 %v833
        %930 = vmatpush.msra.mxu0 %v832
        %931 = vmatpush.msra.mxu0 %v831
        %932 = vmatmul.f32.gmra.mxu0 %v896
        %v933 = vpop.f32.mrf.mxu0
        %v934 = vadd.f32 %v862, %v933
        %935 = vmatmul.f32.gmra.mxu0 %v899
        %v936 = vpop.f32.mrf.mxu0
        %v937 = vadd.f32 %v867, %v936
        %938 = vmatmul.f32.gmra.mxu0 %v902
        %v939 = vpop.f32.mrf.mxu0
        %v940 = vadd.f32 %v872, %v939
        %941 = vmatmul.f32.gmra.mxu0 %v905
        %v942 = vpop.f32.mrf.mxu0
        %v943 = vadd.f32 %v877, %v942
        %944 = vmatmul.f32.gmra.mxu0 %v908
        %v945 = vpop.f32.mrf.mxu0
        %v946 = vadd.f32 %v882, %v945
        %947 = vmatmul.f32.gmra.mxu0 %v911
        %v948 = vpop.f32.mrf.mxu0
        %v949 = vadd.f32 %v887, %v948
        %950 = vmatmul.f32.gmra.mxu0 %v914
        %v951 = vpop.f32.mrf.mxu0
        %v952 = vadd.f32 %v892, %v951
        %953 = vdwg.mxu0
        %v954 = vtanh.pop %v934
        %v955 = vtanh.pop %v937
        %v956 = vtanh.pop %v940
        %v957 = vtanh.pop %v943
        %v958 = vtanh.pop %v946
        %v959 = vtanh.pop %v949
        %v960 = vtanh.pop %v952
        %v961 = vmul.f32 %v954, %v838
        %v962 = vmul.f32 %v955, %v839
        %v963 = vmul.f32 %v956, %v840
        %v964 = vmul.f32 %v957, %v841
        %v965 = vmul.f32 %v958, %v842
        %v966 = vmul.f32 %v959, %v843
        %v967 = vmul.f32 %v960, %v844
        %v968 = vadd.f32 %v817, %v961
        %v969 = vadd.f32 %v818, %v962
        %v970 = vadd.f32 %v819, %v963
        %v971 = vadd.f32 %v820, %v964
        %v972 = vadd.f32 %v821, %v965
        %v973 = vadd.f32 %v822, %v966
        %v974 = vadd.f32 %v823, %v967
        %s975 = scalar_lea.vmem %s4, 56
        %v976 = vld [vmem:[%s975] sm:$0xff]
        %v977 = vld [vmem:[%s975 + $0x8] sm:$0xff]
        %v978 = vld [vmem:[%s975 + $0x10] sm:$0xff]
        %v979 = vld [vmem:[%s975 + $0x18] sm:$0xff]
        %v980 = vld [vmem:[%s975 + $0x20] sm:$0xff]
        %v981 = vld [vmem:[%s975 + $0x28] sm:$0xff]
        %v982 = vld [vmem:[%s975 + $0x30] sm:$0xff]
        %s983 = scalar_lea.vmem %s5, 56
        %v984 = vld [vmem:[%s983] sm:$0xff]
        %v985 = vld [vmem:[%s983 + $0x8] sm:$0xff]
        %v986 = vld [vmem:[%s983 + $0x10] sm:$0xff]
        %v987 = vld [vmem:[%s983 + $0x18] sm:$0xff]
        %v988 = vld [vmem:[%s983 + $0x20] sm:$0xff]
        %v989 = vld [vmem:[%s983 + $0x28] sm:$0xff]
        %v990 = vld [vmem:[%s983 + $0x30] sm:$0xff]
        %992 = vset.pattern.permute.xlu0 0
        %993 = vperm.xlu0 %992, %v984
        %v994 = vpop.permute.xlu0 %993
        %997 = vset.pattern.permute.xlu0 0
        %998 = vperm.xlu0 %997, %v985
        %v999 = vpop.permute.xlu0 %998
        %1002 = vset.pattern.permute.xlu0 0
        %1003 = vperm.xlu0 %1002, %v986
        %v1004 = vpop.permute.xlu0 %1003
        %1007 = vset.pattern.permute.xlu0 0
        %1008 = vperm.xlu0 %1007, %v987
        %v1009 = vpop.permute.xlu0 %1008
        %1012 = vset.pattern.permute.xlu0 0
        %1013 = vperm.xlu0 %1012, %v988
        %v1014 = vpop.permute.xlu0 %1013
        %1017 = vset.pattern.permute.xlu0 0
        %1018 = vperm.xlu0 %1017, %v989
        %v1019 = vpop.permute.xlu0 %1018
        %1022 = vset.pattern.permute.xlu0 0
        %1023 = vperm.xlu0 %1022, %v990
        %v1024 = vpop.permute.xlu0 %1023
        %v1027 = vsel %vm894, %v976, 0
        %v1030 = vsel %vm894, %v977, 0
        %v1033 = vsel %vm894, %v978, 0
        %v1036 = vsel %vm894, %v979, 0
        %v1039 = vsel %vm894, %v980, 0
        %v1042 = vsel %vm894, %v981, 0
        %v1045 = vsel %vm894, %v982, 0
        %1047 = vmatpush.msra.mxu0 0.0
        %1048 = vmatpush.msra.mxu0 0.0
        %1049 = vmatpush.msra.mxu0 0.0
        %1050 = vmatpush.msra.mxu0 0.0
        %1051 = vmatpush.msra.mxu0 0.0
        %1052 = vmatpush.msra.mxu0 0.0
        %1053 = vmatpush.msra.mxu0 0.0
        %1054 = vmatpush.msra.mxu0 0.0
        %1055 = vmatpush.msra.mxu0 0.0
        %1056 = vmatpush.msra.mxu0 %v974
        %1057 = vmatpush.msra.mxu0 %v973
        %1058 = vmatpush.msra.mxu0 %v972
        %1059 = vmatpush.msra.mxu0 %v971
        %1060 = vmatpush.msra.mxu0 %v970
        %1061 = vmatpush.msra.mxu0 %v969
        %1062 = vmatpush.msra.mxu0 %v968
        %1063 = vmatmul.f32.gmra.mxu0 %v1027
        %v1064 = vpop.f32.mrf.mxu0
        %v1065 = vadd.f32 %v994, %v1064
        %1066 = vmatmul.f32.gmra.mxu0 %v1030
        %v1067 = vpop.f32.mrf.mxu0
        %v1068 = vadd.f32 %v999, %v1067
        %1069 = vmatmul.f32.gmra.mxu0 %v1033
        %v1070 = vpop.f32.mrf.mxu0
        %v1071 = vadd.f32 %v1004, %v1070
        %1072 = vmatmul.f32.gmra.mxu0 %v1036
        %v1073 = vpop.f32.mrf.mxu0
        %v1074 = vadd.f32 %v1009, %v1073
        %1075 = vmatmul.f32.gmra.mxu0 %v1039
        %v1076 = vpop.f32.mrf.mxu0
        %v1077 = vadd.f32 %v1014, %v1076
        %1078 = vmatmul.f32.gmra.mxu0 %v1042
        %v1079 = vpop.f32.mrf.mxu0
        %v1080 = vadd.f32 %v1019, %v1079
        %1081 = vmatmul.f32.gmra.mxu0 %v1045
        %v1082 = vpop.f32.mrf.mxu0
        %v1083 = vadd.f32 %v1024, %v1082
        %1084 = vdwg.mxu0
        %v1085 = vtanh.pop %v1065
        %v1086 = vtanh.pop %v1068
        %v1087 = vtanh.pop %v1071
        %v1088 = vtanh.pop %v1074
        %v1089 = vtanh.pop %v1077
        %v1090 = vtanh.pop %v1080
        %v1091 = vtanh.pop %v1083
        %v1092 = vmul.f32 %v1085, %v838
        %v1093 = vmul.f32 %v1086, %v839
        %v1094 = vmul.f32 %v1087, %v840
        %v1095 = vmul.f32 %v1088, %v841
        %v1096 = vmul.f32 %v1089, %v842
        %v1097 = vmul.f32 %v1090, %v843
        %v1098 = vmul.f32 %v1091, %v844
        %v1099 = vadd.f32 %v817, %v1092
        %v1100 = vadd.f32 %v818, %v1093
        %v1101 = vadd.f32 %v819, %v1094
        %v1102 = vadd.f32 %v820, %v1095
        %v1103 = vadd.f32 %v821, %v1096
        %v1104 = vadd.f32 %v822, %v1097
        %v1105 = vadd.f32 %v823, %v1098
        %s1106 = scalar_lea.vmem %s4, 112
        %v1107 = vld [vmem:[%s1106] sm:$0xff]
        %v1108 = vld [vmem:[%s1106 + $0x8] sm:$0xff]
        %v1109 = vld [vmem:[%s1106 + $0x10] sm:$0xff]
        %v1110 = vld [vmem:[%s1106 + $0x18] sm:$0xff]
        %v1111 = vld [vmem:[%s1106 + $0x20] sm:$0xff]
        %v1112 = vld [vmem:[%s1106 + $0x28] sm:$0xff]
        %v1113 = vld [vmem:[%s1106 + $0x30] sm:$0xff]
        %s1114 = scalar_lea.vmem %s5, 112
        %v1115 = vld [vmem:[%s1114] sm:$0xff]
        %v1116 = vld [vmem:[%s1114 + $0x8] sm:$0xff]
        %v1117 = vld [vmem:[%s1114 + $0x10] sm:$0xff]
        %v1118 = vld [vmem:[%s1114 + $0x18] sm:$0xff]
        %v1119 = vld [vmem:[%s1114 + $0x20] sm:$0xff]
        %v1120 = vld [vmem:[%s1114 + $0x28] sm:$0xff]
        %v1121 = vld [vmem:[%s1114 + $0x30] sm:$0xff]
        %1123 = vset.pattern.permute.xlu0 0
        %1124 = vperm.xlu0 %1123, %v1115
        %v1125 = vpop.permute.xlu0 %1124
        %1128 = vset.pattern.permute.xlu0 0
        %1129 = vperm.xlu0 %1128, %v1116
        %v1130 = vpop.permute.xlu0 %1129
        %1133 = vset.pattern.permute.xlu0 0
        %1134 = vperm.xlu0 %1133, %v1117
        %v1135 = vpop.permute.xlu0 %1134
        %1138 = vset.pattern.permute.xlu0 0
        %1139 = vperm.xlu0 %1138, %v1118
        %v1140 = vpop.permute.xlu0 %1139
        %1143 = vset.pattern.permute.xlu0 0
        %1144 = vperm.xlu0 %1143, %v1119
        %v1145 = vpop.permute.xlu0 %1144
        %1148 = vset.pattern.permute.xlu0 0
        %1149 = vperm.xlu0 %1148, %v1120
        %v1150 = vpop.permute.xlu0 %1149
        %1153 = vset.pattern.permute.xlu0 0
        %1154 = vperm.xlu0 %1153, %v1121
        %v1155 = vpop.permute.xlu0 %1154
        %v1158 = vsel %vm894, %v1107, 0
        %v1161 = vsel %vm894, %v1108, 0
        %v1164 = vsel %vm894, %v1109, 0
        %v1167 = vsel %vm894, %v1110, 0
        %v1170 = vsel %vm894, %v1111, 0
        %v1173 = vsel %vm894, %v1112, 0
        %v1176 = vsel %vm894, %v1113, 0
        %1178 = vmatpush.msra.mxu0 0.0
        %1179 = vmatpush.msra.mxu0 0.0
        %1180 = vmatpush.msra.mxu0 0.0
        %1181 = vmatpush.msra.mxu0 0.0
        %1182 = vmatpush.msra.mxu0 0.0
        %1183 = vmatpush.msra.mxu0 0.0
        %1184 = vmatpush.msra.mxu0 0.0
        %1185 = vmatpush.msra.mxu0 0.0
        %1186 = vmatpush.msra.mxu0 0.0
        %1187 = vmatpush.msra.mxu0 %v1105
        %1188 = vmatpush.msra.mxu0 %v1104
        %1189 = vmatpush.msra.mxu0 %v1103
        %1190 = vmatpush.msra.mxu0 %v1102
        %1191 = vmatpush.msra.mxu0 %v1101
        %1192 = vmatpush.msra.mxu0 %v1100
        %1193 = vmatpush.msra.mxu0 %v1099
        %1194 = vmatmul.f32.gmra.mxu0 %v1158
        %v1195 = vpop.f32.mrf.mxu0
        %v1196 = vadd.f32 %v1125, %v1195
        %1197 = vmatmul.f32.gmra.mxu0 %v1161
        %v1198 = vpop.f32.mrf.mxu0
        %v1199 = vadd.f32 %v1130, %v1198
        %1200 = vmatmul.f32.gmra.mxu0 %v1164
        %v1201 = vpop.f32.mrf.mxu0
        %v1202 = vadd.f32 %v1135, %v1201
        %1203 = vmatmul.f32.gmra.mxu0 %v1167
        %v1204 = vpop.f32.mrf.mxu0
        %v1205 = vadd.f32 %v1140, %v1204
        %1206 = vmatmul.f32.gmra.mxu0 %v1170
        %v1207 = vpop.f32.mrf.mxu0
        %v1208 = vadd.f32 %v1145, %v1207
        %1209 = vmatmul.f32.gmra.mxu0 %v1173
        %v1210 = vpop.f32.mrf.mxu0
        %v1211 = vadd.f32 %v1150, %v1210
        %1212 = vmatmul.f32.gmra.mxu0 %v1176
        %v1213 = vpop.f32.mrf.mxu0
        %v1214 = vadd.f32 %v1155, %v1213
        %1215 = vdwg.mxu0
        %v1216 = vtanh.pop %v1196
        %v1217 = vtanh.pop %v1199
        %v1218 = vtanh.pop %v1202
        %v1219 = vtanh.pop %v1205
        %v1220 = vtanh.pop %v1208
        %v1221 = vtanh.pop %v1211
        %v1222 = vtanh.pop %v1214
        %v1223 = vmul.f32 %v1216, %v838
        %v1224 = vmul.f32 %v1217, %v839
        %v1225 = vmul.f32 %v1218, %v840
        %v1226 = vmul.f32 %v1219, %v841
        %v1227 = vmul.f32 %v1220, %v842
        %v1228 = vmul.f32 %v1221, %v843
        %v1229 = vmul.f32 %v1222, %v844
        %v1230 = vadd.f32 %v817, %v1223
        %v1231 = vadd.f32 %v818, %v1224
        %v1232 = vadd.f32 %v819, %v1225
        %v1233 = vadd.f32 %v820, %v1226
        %v1234 = vadd.f32 %v821, %v1227
        %v1235 = vadd.f32 %v822, %v1228
        %v1236 = vadd.f32 %v823, %v1229
        %s1237 = scalar_lea.vmem %s4, 168
        %v1238 = vld [vmem:[%s1237] sm:$0xff]
        %v1239 = vld [vmem:[%s1237 + $0x8] sm:$0xff]
        %v1240 = vld [vmem:[%s1237 + $0x10] sm:$0xff]
        %v1241 = vld [vmem:[%s1237 + $0x18] sm:$0xff]
        %v1242 = vld [vmem:[%s1237 + $0x20] sm:$0xff]
        %v1243 = vld [vmem:[%s1237 + $0x28] sm:$0xff]
        %v1244 = vld [vmem:[%s1237 + $0x30] sm:$0xff]
        %s1245 = scalar_lea.vmem %s5, 168
        %v1246 = vld [vmem:[%s1245] sm:$0xff]
        %v1247 = vld [vmem:[%s1245 + $0x8] sm:$0xff]
        %v1248 = vld [vmem:[%s1245 + $0x10] sm:$0xff]
        %v1249 = vld [vmem:[%s1245 + $0x18] sm:$0xff]
        %v1250 = vld [vmem:[%s1245 + $0x20] sm:$0xff]
        %v1251 = vld [vmem:[%s1245 + $0x28] sm:$0xff]
        %v1252 = vld [vmem:[%s1245 + $0x30] sm:$0xff]
        %1254 = vset.pattern.permute.xlu0 0
        %1255 = vperm.xlu0 %1254, %v1246
        %v1256 = vpop.permute.xlu0 %1255
        %1259 = vset.pattern.permute.xlu0 0
        %1260 = vperm.xlu0 %1259, %v1247
        %v1261 = vpop.permute.xlu0 %1260
        %1264 = vset.pattern.permute.xlu0 0
        %1265 = vperm.xlu0 %1264, %v1248
        %v1266 = vpop.permute.xlu0 %1265
        %1269 = vset.pattern.permute.xlu0 0
        %1270 = vperm.xlu0 %1269, %v1249
        %v1271 = vpop.permute.xlu0 %1270
        %1274 = vset.pattern.permute.xlu0 0
        %1275 = vperm.xlu0 %1274, %v1250
        %v1276 = vpop.permute.xlu0 %1275
        %1279 = vset.pattern.permute.xlu0 0
        %1280 = vperm.xlu0 %1279, %v1251
        %v1281 = vpop.permute.xlu0 %1280
        %1284 = vset.pattern.permute.xlu0 0
        %1285 = vperm.xlu0 %1284, %v1252
        %v1286 = vpop.permute.xlu0 %1285
        %v1289 = vsel %vm894, %v1238, 0
        %v1292 = vsel %vm894, %v1239, 0
        %v1295 = vsel %vm894, %v1240, 0
        %v1298 = vsel %vm894, %v1241, 0
        %v1301 = vsel %vm894, %v1242, 0
        %v1304 = vsel %vm894, %v1243, 0
        %v1307 = vsel %vm894, %v1244, 0
        %1309 = vmatpush.msra.mxu0 0.0
        %1310 = vmatpush.msra.mxu0 0.0
        %1311 = vmatpush.msra.mxu0 0.0
        %1312 = vmatpush.msra.mxu0 0.0
        %1313 = vmatpush.msra.mxu0 0.0
        %1314 = vmatpush.msra.mxu0 0.0
        %1315 = vmatpush.msra.mxu0 0.0
        %1316 = vmatpush.msra.mxu0 0.0
        %1317 = vmatpush.msra.mxu0 0.0
        %1318 = vmatpush.msra.mxu0 %v1236
        %1319 = vmatpush.msra.mxu0 %v1235
        %1320 = vmatpush.msra.mxu0 %v1234
        %1321 = vmatpush.msra.mxu0 %v1233
        %1322 = vmatpush.msra.mxu0 %v1232
        %1323 = vmatpush.msra.mxu0 %v1231
        %1324 = vmatpush.msra.mxu0 %v1230
        %1325 = vmatmul.f32.gmra.mxu0 %v1289
        %v1326 = vpop.f32.mrf.mxu0
        %v1327 = vadd.f32 %v1256, %v1326
        %1328 = vmatmul.f32.gmra.mxu0 %v1292
        %v1329 = vpop.f32.mrf.mxu0
        %v1330 = vadd.f32 %v1261, %v1329
        %1331 = vmatmul.f32.gmra.mxu0 %v1295
        %v1332 = vpop.f32.mrf.mxu0
        %v1333 = vadd.f32 %v1266, %v1332
        %1334 = vmatmul.f32.gmra.mxu0 %v1298
        %v1335 = vpop.f32.mrf.mxu0
        %v1336 = vadd.f32 %v1271, %v1335
        %1337 = vmatmul.f32.gmra.mxu0 %v1301
        %v1338 = vpop.f32.mrf.mxu0
        %v1339 = vadd.f32 %v1276, %v1338
        %1340 = vmatmul.f32.gmra.mxu0 %v1304
        %v1341 = vpop.f32.mrf.mxu0
        %v1342 = vadd.f32 %v1281, %v1341
        %1343 = vmatmul.f32.gmra.mxu0 %v1307
        %v1344 = vpop.f32.mrf.mxu0
        %v1345 = vadd.f32 %v1286, %v1344
        %1346 = vdwg.mxu0
        %v1347 = vtanh.pop %v1327
        %v1348 = vtanh.pop %v1330
        %v1349 = vtanh.pop %v1333
        %v1350 = vtanh.pop %v1336
        %v1351 = vtanh.pop %v1339
        %v1352 = vtanh.pop %v1342
        %v1353 = vtanh.pop %v1345
        %v1354 = vmul.f32 %v1347, %v838
        %v1355 = vmul.f32 %v1348, %v839
        %v1356 = vmul.f32 %v1349, %v840
        %v1357 = vmul.f32 %v1350, %v841
        %v1358 = vmul.f32 %v1351, %v842
        %v1359 = vmul.f32 %v1352, %v843
        %v1360 = vmul.f32 %v1353, %v844
        %v1361 = vadd.f32 %v817, %v1354
        %v1362 = vadd.f32 %v818, %v1355
        %v1363 = vadd.f32 %v819, %v1356
        %v1364 = vadd.f32 %v820, %v1357
        %v1365 = vadd.f32 %v821, %v1358
        %v1366 = vadd.f32 %v822, %v1359
        %v1367 = vadd.f32 %v823, %v1360
        %v1368 = vld [vmem:[%s6] sm:$0x1]
        %v1369 = vld [vmem:[#allocation2] sm:$0x1]
        %1371 = vset.pattern.permute.xlu0 0
        %1372 = vperm.xlu0 %1371, %v1369
        %v1373 = vpop.permute.xlu0 %1372
        %v1375 = vperm.slane %v1373, 0
        %v1377 = vsel %vm894, %v1368, 0
        %1379 = vmatpush.msra.mxu0 0.0
        %1380 = vmatpush.msra.mxu0 0.0
        %1381 = vmatpush.msra.mxu0 0.0
        %1382 = vmatpush.msra.mxu0 0.0
        %1383 = vmatpush.msra.mxu0 0.0
        %1384 = vmatpush.msra.mxu0 0.0
        %1385 = vmatpush.msra.mxu0 0.0
        %1386 = vmatpush.msra.mxu0 0.0
        %1387 = vmatpush.msra.mxu0 0.0
        %1388 = vmatpush.msra.mxu0 %v1367
        %1389 = vmatpush.msra.mxu0 %v1366
        %1390 = vmatpush.msra.mxu0 %v1365
        %1391 = vmatpush.msra.mxu0 %v1364
        %1392 = vmatpush.msra.mxu0 %v1363
        %1393 = vmatpush.msra.mxu0 %v1362
        %1394 = vmatpush.msra.mxu0 %v1361
        %1395 = vmatmul.f32.gmra.mxu0 %v1377
        %v1396 = vpop.f32.mrf.mxu0
        %v1397 = vadd.f32 %v1375, %v1396
        %1398 = vdwg.mxu0
        %1399 = vst [vmem:[%s297] sm:$0x1] %v1397
        %s1400 = sand.u32 %s205, 1
        %s1401 = scalar_lea.sflag [#allocation4], %s1400
        %s1402 = sand.u32 %s205, 1
        %s1403 = scalar_lea.vmem [#allocation3], %s1402
        // Predicated region
        $region53: #{modified_mlp_pallas.1} parent=51 // pred_check
          %p1404 = pneg %p215
        $region54: #{modified_mlp_pallas.1} parent=51 // pred_check_branch
          %1406 = sbr.rel (%p1404) target = $region56
        $region55: #{modified_mlp_pallas.1} parent=51 // pred_region
          %1408 = vsyncadd %s1401, 0
          %s1409 = scalar_lea.hbm %s8, %s24
          %s1411 = sshll.u32 %s1403, 4
          %s1412 = int_to_ptr.vmem [resolvable:$true] %s1411
          %s1413 = sshll.u32 %s1409, 4
          %s1414 = int_to_ptr.hbm [resolvable:$true] %s1413
          %1416 = dma.vmem_to_hbm [thread:$0]  %s1412, 16, %s1414, %s1401
        $region56: #{modified_mlp_pallas.1} parent=51 // pred_fallthru
          _
      $region52: #{modified_mlp_pallas.1} parent=5 // pred_fallthru
        _
      %p1417 = scmp.le.s32.totalorder 2, %s19
      // Predicated region
      $region57: #{modified_mlp_pallas.1} parent=5 // pred_check
        %p1418 = pneg %p1417
      $region58: #{modified_mlp_pallas.1} parent=5 // pred_check_branch
        %1420 = sbr.rel (%p1418) target = $region60
      $region59: #{modified_mlp_pallas.1} parent=5 // pred_region
        %s1421 = ssub.s32 %s19, 2
        // Predicated region
        $region61: #{modified_mlp_pallas.1} parent=59 // pred_check
          %p1422 = pneg %p221
        $region62: #{modified_mlp_pallas.1} parent=59 // pred_check_branch
          %1424 = sbr.rel (%p1422) target = $region64
        $region63: #{modified_mlp_pallas.1} parent=59 // pred_region
          %s1425 = sand.u32 %s206, 1
          %s1426 = scalar_lea.sflag [#allocation4], %s1425
          %s1427 = sand.u32 %s206, 1
          %s1428 = scalar_lea.vmem [#allocation3], %s1427
          %1430 = dma.done %s1426, 16
        $region64: #{modified_mlp_pallas.1} parent=59 // pred_fallthru
          _
      $region60: #{modified_mlp_pallas.1} parent=5 // pred_fallthru
        _
    $region6: #{modified_mlp_pallas.1} parent=1 // loop_footer
      %s23 = sadd.s32 1, %s19
    $region7: #{modified_mlp_pallas.1} parent=1 // loop_footer_branch
      %18 = sbr.rel target = $region3
    $region8: #{modified_mlp_pallas.1} parent=1 // loop_exit
      _
    %1431 = vsyncpa [#allocation4], 1
    %s1432 = scalar_lea.sflag [#allocation4], 1
    %1433 = vsyncpa %s1432, 1

</llo_original>
